<compile_context>
chip_gen: v6e
topology: v6e:2x2x1
jax: 0.10.0
libtpu: 0.0.40
codegen_flags: <defaults>
</compile_context>

<pallas_src>
import jax
import jax.numpy as jnp
from jax.experimental import pallas as pl
from jax.experimental.pallas import tpu as pltpu

BN_EPS = 1e-5


def _regressor_heads_kernel(g_ref, w1_ref, b1_ref, gamma_ref, beta_ref,
                            w2_ref, b2_ref, mask_ref, out_ref):
    """All n_tasks MLPRegressor heads in one shot (block-diagonal task packing).

    g_ref:     (B, T*F)    per-task readout representations, concatenated on lanes
    w1_ref:    (T*F, T*H)  block-diagonal first Linear weights
    b1_ref:    (1, T*H)    first Linear bias (per-task rows concatenated)
    gamma_ref: (1, T*H)    BatchNorm1d weight
    beta_ref:  (1, T*H)    BatchNorm1d bias
    w2_ref:    (1, T*H)    second Linear weight (output dim 1 per task)
    b2_ref:    (1, T)      second Linear bias
    mask_ref:  (T*H, T)    static block-selection matrix (1 inside task-t block)
    out_ref:   (B, T)      predictions, final layout
    """
    g = g_ref[...]
    w1 = w1_ref[...]
    b1 = b1_ref[...]
    gamma = gamma_ref[...]
    beta = beta_ref[...]
    w2 = w2_ref[...]
    b2 = b2_ref[...]
    mask = mask_ref[...]

    # Dropout(p=0) is identity.  Linear(F -> H) for ALL tasks in one MXU pass.
    h = jnp.dot(g, w1, preferred_element_type=jnp.float32) + b1        # (B, T*H)
    h = jnp.maximum(h, 0.0)

    # BatchNorm1d (training mode, biased variance).  Two-pass statistics (no
    # E[x^2]-E[x]^2 cancellation); B-reduction done on the MXU via a ones row.
    inv_b = 1.0 / h.shape[0]
    ones_row = jnp.ones((1, h.shape[0]), jnp.float32)                  # (1, B)
    mean = jnp.dot(ones_row, h, preferred_element_type=jnp.float32) * inv_b   # (1, T*H)
    centered = h - mean
    var = jnp.dot(ones_row, centered * centered,
                  preferred_element_type=jnp.float32) * inv_b          # (1, T*H)

    # Fuse BN affine + second Linear(H -> 1 per task):
    #   y_t = sum_j (h*a)[:, tH+j] + sum_j (beta*w2 - mean*a)[tH+j] + b2_t
    a = gamma * w2 * jax.lax.rsqrt(var + BN_EPS)                       # (1, T*H)
    y = jnp.dot(h * a, mask, preferred_element_type=jnp.float32)       # (B, T)
    const = jnp.dot(beta * w2 - mean * a, mask,
                    preferred_element_type=jnp.float32) + b2           # (1, T)

    out_ref[...] = (y + const).astype(out_ref.dtype)                   # (B, T)


def pack_head_params(w1, b1, gamma, beta, w2, b2):
    """Packs per-task MLPRegressor parameters ONCE (call outside the hot forward).

    w1: (T, F, H), b1/gamma/beta/w2: (T, 1, H), b2: (T, 1, 1)
    Returns (w1_blk (T*F, T*H), b1 (1,T*H), gamma (1,T*H), beta (1,T*H),
             w2 (1,T*H), b2 (1,T), mask (T*H, T)).
    """
    T, F, H = w1.shape
    eye = jnp.eye(T, dtype=w1.dtype)
    # Block-diagonal pack: w1_blk[t*F:(t+1)*F, t*H:(t+1)*H] = w1[t]
    w1_blk = jnp.einsum('tfh,ts->tfsh', w1, eye).reshape(T * F, T * H)
    row = lambda x: x.reshape(1, T * H)
    mask = jnp.repeat(jnp.eye(T, dtype=jnp.float32), H, axis=0)        # (T*H, T)
    return (w1_blk, row(b1), row(gamma), row(beta), row(w2),
            b2.reshape(1, T), mask)


def bypass_regressor_forward(g, w1_blk, b1_row, gamma_row, beta_row,
                             w2_row, b2_row, mask):
    """Runs the n_tasks MLPRegressor heads and concatenates predictions.

    g: (n_tasks, B, F) per-task readout representations g_t.  Returns (B, n_tasks).
    """
    T, B, F = g.shape
    TH = w1_blk.shape[1]
    H = TH // T

    # (T, B, F) -> (B, T*F): in the real model the per-task readouts would be
    # concatenated directly into this layout by the surrounding graph.
    g_packed = jnp.transpose(g, (1, 0, 2)).reshape(B, T * F)

    cost = pl.CostEstimate(
        flops=(2 * B * (T * F) * TH          # block-diag first matmul
               + 2 * 2 * B * TH              # two ones-row stat matmuls
               + 2 * (B + 1) * TH * T        # epilogue matmuls
               + 10 * B * TH),               # elementwise
        transcendentals=TH,                  # rsqrt
        bytes_accessed=4 * (g_packed.size + w1_blk.size + 4 * TH + T
                            + TH * T + B * T),
    )

    out = pl.pallas_call(
        _regressor_heads_kernel,
        out_shape=jax.ShapeDtypeStruct((B, T), jnp.float32),
        cost_estimate=cost,
        compiler_params=pltpu.CompilerParams(vmem_limit_bytes=32 * 1024 * 1024),
    )(g_packed, w1_blk, b1_row, gamma_row, beta_row, w2_row, b2_row, mask)
    return out


def reference_forward(g, w1, b1, gamma, beta, w2, b2):
    """Pure-JAX reference (per-task loop, matches torch semantics)."""
    preds = []
    for t in range(g.shape[0]):
        h = g[t] @ w1[t] + b1[t]
        h = jnp.maximum(h, 0.0)
        mean = jnp.mean(h, axis=0, keepdims=True)
        var = jnp.mean((h - mean) ** 2, axis=0, keepdims=True)
        hn = (h - mean) / jnp.sqrt(var + BN_EPS) * gamma[t] + beta[t]
        y = jnp.sum(hn * w2[t], axis=-1, keepdims=True) + b2[t]
        preds.append(y)
    return jnp.concatenate(preds, axis=1)


if __name__ == "__main__":
    # Small shapes consistent with the module.
    n_tasks = 4
    batch = 8                    # B graphs in the batch
    readout_feats = 32           # F
    regressor_hidden_feats = 32  # H   (T*F = T*H = 128: exactly one MXU tile)

    key = jax.random.PRNGKey(0)
    kg, k1, kb1, k2, kb2 = jax.random.split(key, 5)

    # Per-task readout representations g_t (stand-in for readouts[t](bg, combined_repr)).
    g = jax.random.normal(kg, (n_tasks, batch, readout_feats), jnp.float32)

    # Deterministic per-task MLPRegressor parameters.
    s1 = 1.0 / jnp.sqrt(readout_feats)
    s2 = 1.0 / jnp.sqrt(regressor_hidden_feats)
    w1 = jax.random.uniform(k1, (n_tasks, readout_feats, regressor_hidden_feats),
                            jnp.float32, -s1, s1)
    b1 = jax.random.uniform(kb1, (n_tasks, 1, regressor_hidden_feats),
                            jnp.float32, -s1, s1)
    gamma = jnp.ones((n_tasks, 1, regressor_hidden_feats), jnp.float32)
    beta = jnp.zeros((n_tasks, 1, regressor_hidden_feats), jnp.float32)
    w2 = jax.random.uniform(k2, (n_tasks, 1, regressor_hidden_feats),
                            jnp.float32, -s2, s2)
    b2 = jax.random.uniform(kb2, (n_tasks, 1, 1), jnp.float32, -s2, s2)

    # Pack parameters once, outside the hot path.
    packed = pack_head_params(w1, b1, gamma, beta, w2, b2)

    out = bypass_regressor_forward(g, *packed)
    out = jax.block_until_ready(out)

    ref = reference_forward(g, w1, b1, gamma, beta, w2, b2)
    assert out.shape == (batch, n_tasks), out.shape
    assert jnp.allclose(out, ref, atol=1e-4, rtol=1e-4), (out, ref)

    print("KERNEL_OK")
</pallas_src>

<mosaic_0001>
module attributes {stable_mosaic.version = 11 : i64} {
  func.func @_regressor_heads_kernel(%arg0: memref<8x128xf32, #tpu.memory_space<vmem>>, %arg1: memref<128x128xf32, #tpu.memory_space<vmem>>, %arg2: memref<1x128xf32, #tpu.memory_space<vmem>>, %arg3: memref<1x128xf32, #tpu.memory_space<vmem>>, %arg4: memref<1x128xf32, #tpu.memory_space<vmem>>, %arg5: memref<1x128xf32, #tpu.memory_space<vmem>>, %arg6: memref<1x4xf32, #tpu.memory_space<vmem>>, %arg7: memref<128x4xf32, #tpu.memory_space<vmem>>, %arg8: memref<8x4xf32, #tpu.memory_space<vmem>>) attributes {dimension_semantics = [], scalar_prefetch = 0 : i64, scratch_operands = 0 : i64, tpu.core_type = #tpu.core_type<tc>} {
    %c0 = arith.constant 0 : index
    %c0_0 = arith.constant 0 : index
    %0 = vector.load %arg0[%c0, %c0_0] : memref<8x128xf32, #tpu.memory_space<vmem>>, vector<8x128xf32>
    %c0_1 = arith.constant 0 : index
    %c0_2 = arith.constant 0 : index
    %1 = vector.load %arg1[%c0_1, %c0_2] : memref<128x128xf32, #tpu.memory_space<vmem>>, vector<128x128xf32>
    %c0_3 = arith.constant 0 : index
    %c0_4 = arith.constant 0 : index
    %2 = vector.load %arg2[%c0_3, %c0_4] : memref<1x128xf32, #tpu.memory_space<vmem>>, vector<1x128xf32>
    %c0_5 = arith.constant 0 : index
    %c0_6 = arith.constant 0 : index
    %3 = vector.load %arg3[%c0_5, %c0_6] : memref<1x128xf32, #tpu.memory_space<vmem>>, vector<1x128xf32>
    %c0_7 = arith.constant 0 : index
    %c0_8 = arith.constant 0 : index
    %4 = vector.load %arg4[%c0_7, %c0_8] : memref<1x128xf32, #tpu.memory_space<vmem>>, vector<1x128xf32>
    %c0_9 = arith.constant 0 : index
    %c0_10 = arith.constant 0 : index
    %5 = vector.load %arg5[%c0_9, %c0_10] : memref<1x128xf32, #tpu.memory_space<vmem>>, vector<1x128xf32>
    %c0_11 = arith.constant 0 : index
    %c0_12 = arith.constant 0 : index
    %6 = vector.load %arg6[%c0_11, %c0_12] : memref<1x4xf32, #tpu.memory_space<vmem>>, vector<1x4xf32>
    %c0_13 = arith.constant 0 : index
    %c0_14 = arith.constant 0 : index
    %7 = vector.load %arg7[%c0_13, %c0_14] : memref<128x4xf32, #tpu.memory_space<vmem>>, vector<128x4xf32>
    %cst = arith.constant dense<0.000000e+00> : vector<8x128xf32>
    %8 = tpu.matmul %0, %1, %cst {dimension_numbers = #tpu.dot_dimension_numbers<[1], [0], [0], [1], [0, 0, 1, 1], [], []>} : vector<8x128xf32>, vector<128x128xf32>, vector<8x128xf32> -> vector<8x128xf32>
    %9 = vector.broadcast %2 : vector<1x128xf32> to vector<8x128xf32>
    %10 = arith.addf %8, %9 : vector<8x128xf32>
    %cst_15 = arith.constant 0.000000e+00 : f32
    %11 = vector.broadcast %cst_15 : f32 to vector<8x128xf32>
    %12 = arith.maximumf %10, %11 : vector<8x128xf32>
    %cst_16 = arith.constant 1.000000e+00 : f32
    %13 = vector.broadcast %cst_16 : f32 to vector<1x8xf32>
    %cst_17 = arith.constant dense<0.000000e+00> : vector<1x128xf32>
    %14 = tpu.matmul %13, %12, %cst_17 {dimension_numbers = #tpu.dot_dimension_numbers<[1], [0], [0], [1], [0, 0, 1, 1], [], []>} : vector<1x8xf32>, vector<8x128xf32>, vector<1x128xf32> -> vector<1x128xf32>
    %cst_18 = arith.constant 1.250000e-01 : f32
    %15 = vector.broadcast %cst_18 : f32 to vector<1x128xf32>
    %16 = arith.mulf %14, %15 : vector<1x128xf32>
    %17 = vector.broadcast %16 : vector<1x128xf32> to vector<8x128xf32>
    %18 = arith.subf %12, %17 : vector<8x128xf32>
    %19 = arith.mulf %18, %18 : vector<8x128xf32>
    %cst_19 = arith.constant dense<0.000000e+00> : vector<1x128xf32>
    %20 = tpu.matmul %13, %19, %cst_19 {dimension_numbers = #tpu.dot_dimension_numbers<[1], [0], [0], [1], [0, 0, 1, 1], [], []>} : vector<1x8xf32>, vector<8x128xf32>, vector<1x128xf32> -> vector<1x128xf32>
    %cst_20 = arith.constant 1.250000e-01 : f32
    %21 = vector.broadcast %cst_20 : f32 to vector<1x128xf32>
    %22 = arith.mulf %20, %21 : vector<1x128xf32>
    %23 = arith.mulf %3, %5 : vector<1x128xf32>
    %cst_21 = arith.constant 9.99999974E-6 : f32
    %24 = vector.broadcast %cst_21 : f32 to vector<1x128xf32>
    %25 = arith.addf %22, %24 : vector<1x128xf32>
    %26 = math.rsqrt %25 : vector<1x128xf32>
    %27 = arith.mulf %23, %26 : vector<1x128xf32>
    %28 = vector.broadcast %27 : vector<1x128xf32> to vector<8x128xf32>
    %29 = arith.mulf %12, %28 : vector<8x128xf32>
    %cst_22 = arith.constant dense<0.000000e+00> : vector<8x4xf32>
    %30 = tpu.matmul %29, %7, %cst_22 {dimension_numbers = #tpu.dot_dimension_numbers<[1], [0], [0], [1], [0, 0, 1, 1], [], []>} : vector<8x128xf32>, vector<128x4xf32>, vector<8x4xf32> -> vector<8x4xf32>
    %31 = arith.mulf %4, %5 : vector<1x128xf32>
    %32 = arith.mulf %16, %27 : vector<1x128xf32>
    %33 = arith.subf %31, %32 : vector<1x128xf32>
    %cst_23 = arith.constant dense<0.000000e+00> : vector<1x4xf32>
    %34 = tpu.matmul %33, %7, %cst_23 {dimension_numbers = #tpu.dot_dimension_numbers<[1], [0], [0], [1], [0, 0, 1, 1], [], []>} : vector<1x128xf32>, vector<128x4xf32>, vector<1x4xf32> -> vector<1x4xf32>
    %35 = arith.addf %34, %6 : vector<1x4xf32>
    %36 = vector.broadcast %35 : vector<1x4xf32> to vector<8x4xf32>
    %37 = arith.addf %30, %36 : vector<8x4xf32>
    %c0_24 = arith.constant 0 : index
    %c0_25 = arith.constant 0 : index
    %38 = vector.load %arg8[%c0_24, %c0_25] : memref<8x4xf32, #tpu.memory_space<vmem>>, vector<8x4xf32>
    tpu.vector_store %arg8[%c0_24, %c0_25], %37 {strides = array<i32>} : memref<8x4xf32, #tpu.memory_space<vmem>>, vector<8x4xf32>,
    return
  }
}

</mosaic_0001>

<llo_original>
// kernel: tpu_custom_call.1
$region0: #{tpu_custom_call.1}
  #allocation0 [shape = 'u32[]', space=smem, size = 0x4, offset = 0x4, fixed_abs, tag = 'smem constant byte address 0x4 - core index']
  #allocation1 [shape = 'u32[144,128]{1,0:T(1,128)}', space=vmem, size = 0x12000, scoped, tag = 'internal scratch']
  %s0 = inlined_call_operand.hbm [shape: f32[8,128], index: 0, kind: input, shape index: {}]
  %s1 = inlined_call_operand.vmem [shape: f32[128,128], index: 1, kind: input, shape index: {}]
  %s2 = inlined_call_operand.vmem [shape: f32[1,128], index: 2, kind: input, shape index: {}]
  %s3 = inlined_call_operand.vmem [shape: f32[1,128], index: 3, kind: input, shape index: {}]
  %s4 = inlined_call_operand.vmem [shape: f32[1,128], index: 4, kind: input, shape index: {}]
  %s5 = inlined_call_operand.vmem [shape: f32[1,128], index: 5, kind: input, shape index: {}]
  %s6 = inlined_call_operand.vmem [shape: f32[1,4], index: 6, kind: input, shape index: {}]
  %s7 = inlined_call_operand.vmem [shape: f32[128,4], index: 7, kind: input, shape index: {}]
  %s8 = inlined_call_operand.vmem [shape: f32[8,4], index: 8, kind: output, shape index: {}]
  %s9 = sld [smem:[#allocation0]]
  $region46: #{tpu_custom_call.1} parent=0
    _
  %s11 = ssub.s32 1, %s9
  %s12 = scalar_select 0, %s11, %s9
  $region1: #{tpu_custom_call.1} parent=0
    #allocation2 [shape = 'u8[4096]{0}', space=vmem, size = 0x1000, scoped, tag = 'input window, operand 0, single buffered']
    #allocation3 [shape = 's32[1]{0}', space=sflag, size = 0x4, scoped, tag = 'scoped memory for tpu_custom_call.1']
    %13 = vsyncpa [#allocation3], 0
    // Predicated region
    $region2: #{tpu_custom_call.1} parent=1 // pred_check
      _
    $region3: #{tpu_custom_call.1} parent=1 // pred_check_branch
      %15 = sbr.rel (0) target = $region5
    $region4: #{tpu_custom_call.1} parent=1 // pred_region
      %s17 = ssub.s32 128, 128
      %18 = vsyncadd [#allocation3], %s17
      %s20 = sshll.u32 [#allocation2], 4
      %s21 = int_to_ptr.vmem [resolvable:$true] %s20
      %23 = dma.hbm_to_vmem [thread:$0]  %s0, 128, %s21, [#allocation3]
    $region5: #{tpu_custom_call.1} parent=1 // pred_fallthru
      _
    // Predicated region
    $region6: #{tpu_custom_call.1} parent=1 // pred_check
      _
    $region7: #{tpu_custom_call.1} parent=1 // pred_check_branch
      %25 = sbr.rel (0) target = $region9
    $region8: #{tpu_custom_call.1} parent=1 // pred_region
      _
    $region9: #{tpu_custom_call.1} parent=1 // pred_fallthru
      _
    // Predicated region
    $region10: #{tpu_custom_call.1} parent=1 // pred_check
      _
    $region11: #{tpu_custom_call.1} parent=1 // pred_check_branch
      %27 = sbr.rel (0) target = $region13
    $region12: #{tpu_custom_call.1} parent=1 // pred_region
      _
    $region13: #{tpu_custom_call.1} parent=1 // pred_fallthru
      _
    // Predicated region
    $region14: #{tpu_custom_call.1} parent=1 // pred_check
      _
    $region15: #{tpu_custom_call.1} parent=1 // pred_check_branch
      %29 = sbr.rel (0) target = $region17
    $region16: #{tpu_custom_call.1} parent=1 // pred_region
      _
    $region17: #{tpu_custom_call.1} parent=1 // pred_fallthru
      _
    // Predicated region
    $region18: #{tpu_custom_call.1} parent=1 // pred_check
      _
    $region19: #{tpu_custom_call.1} parent=1 // pred_check_branch
      %31 = sbr.rel (0) target = $region21
    $region20: #{tpu_custom_call.1} parent=1 // pred_region
      _
    $region21: #{tpu_custom_call.1} parent=1 // pred_fallthru
      _
    // Predicated region
    $region22: #{tpu_custom_call.1} parent=1 // pred_check
      _
    $region23: #{tpu_custom_call.1} parent=1 // pred_check_branch
      %33 = sbr.rel (0) target = $region25
    $region24: #{tpu_custom_call.1} parent=1 // pred_region
      _
    $region25: #{tpu_custom_call.1} parent=1 // pred_fallthru
      _
    // Predicated region
    $region26: #{tpu_custom_call.1} parent=1 // pred_check
      _
    $region27: #{tpu_custom_call.1} parent=1 // pred_check_branch
      %35 = sbr.rel (0) target = $region29
    $region28: #{tpu_custom_call.1} parent=1 // pred_region
      _
    $region29: #{tpu_custom_call.1} parent=1 // pred_fallthru
      _
    // Predicated region
    $region30: #{tpu_custom_call.1} parent=1 // pred_check
      _
    $region31: #{tpu_custom_call.1} parent=1 // pred_check_branch
      %37 = sbr.rel (0) target = $region33
    $region32: #{tpu_custom_call.1} parent=1 // pred_region
      _
    $region33: #{tpu_custom_call.1} parent=1 // pred_fallthru
      _
    // Predicated region
    $region34: #{tpu_custom_call.1} parent=1 // pred_check
      _
    $region35: #{tpu_custom_call.1} parent=1 // pred_check_branch
      %39 = sbr.rel (0) target = $region37
    $region36: #{tpu_custom_call.1} parent=1 // pred_region
      %40 = dma.done [#allocation3], 128
    $region37: #{tpu_custom_call.1} parent=1 // pred_fallthru
      _
    %v41 = vld [vmem:[#allocation2] sm:$0xff]
    %v42 = vld [vmem:[%s1] sm:$0xff]
    %v43 = vld [vmem:[%s1 + $0x8] sm:$0xff]
    %v44 = vld [vmem:[%s1 + $0x10] sm:$0xff]
    %v45 = vld [vmem:[%s1 + $0x18] sm:$0xff]
    %v46 = vld [vmem:[%s1 + $0x20] sm:$0xff]
    %v47 = vld [vmem:[%s1 + $0x28] sm:$0xff]
    %v48 = vld [vmem:[%s1 + $0x30] sm:$0xff]
    %v49 = vld [vmem:[%s1 + $0x38] sm:$0xff]
    %v50 = vld [vmem:[%s1 + $0x40] sm:$0xff]
    %v51 = vld [vmem:[%s1 + $0x48] sm:$0xff]
    %v52 = vld [vmem:[%s1 + $0x50] sm:$0xff]
    %v53 = vld [vmem:[%s1 + $0x58] sm:$0xff]
    %v54 = vld [vmem:[%s1 + $0x60] sm:$0xff]
    %v55 = vld [vmem:[%s1 + $0x68] sm:$0xff]
    %v56 = vld [vmem:[%s1 + $0x70] sm:$0xff]
    %v57 = vld [vmem:[%s1 + $0x78] sm:$0xff]
    %v58 = vld [vmem:[%s2] sm:$0x1]
    %v59 = vld [vmem:[%s3] sm:$0x1]
    %v60 = vld [vmem:[%s4] sm:$0x1]
    %v61 = vld [vmem:[%s5] sm:$0x1]
    %v62 = vld [vmem:[%s6] sm:$0x1]
    %v63 = vld [vmem:[%s7] sm:$0xff]
    %v64 = vld [vmem:[%s7 + $0x8] sm:$0xff]
    %v65 = vld [vmem:[%s7 + $0x10] sm:$0xff]
    %v66 = vld [vmem:[%s7 + $0x18] sm:$0xff]
    %v67 = vld [vmem:[%s7 + $0x20] sm:$0xff]
    %v68 = vld [vmem:[%s7 + $0x28] sm:$0xff]
    %v69 = vld [vmem:[%s7 + $0x30] sm:$0xff]
    %v70 = vld [vmem:[%s7 + $0x38] sm:$0xff]
    %v71 = vld [vmem:[%s7 + $0x40] sm:$0xff]
    %v72 = vld [vmem:[%s7 + $0x48] sm:$0xff]
    %v73 = vld [vmem:[%s7 + $0x50] sm:$0xff]
    %v74 = vld [vmem:[%s7 + $0x58] sm:$0xff]
    %v75 = vld [vmem:[%s7 + $0x60] sm:$0xff]
    %v76 = vld [vmem:[%s7 + $0x68] sm:$0xff]
    %v77 = vld [vmem:[%s7 + $0x70] sm:$0xff]
    %v78 = vld [vmem:[%s7 + $0x78] sm:$0xff]
    %v80 = vlaneseq
    %v81 = vshrl.u32 %v80, 7
    %v82 = vsub.s32 0, %v81
    %v83 = vrot.slane %v58, %v82
    %85 = vmatprep.subr.mxu0 0.0
    %86 = vmatpush1.msra.mxu0 %v57
    %87 = vmatprep.subr.mxu0 0.0
    %88 = vmatpush1.msra.mxu0 %v56
    %89 = vmatprep.subr.mxu0 0.0
    %90 = vmatpush1.msra.mxu0 %v55
    %91 = vmatprep.subr.mxu0 0.0
    %92 = vmatpush1.msra.mxu0 %v54
    %93 = vmatprep.subr.mxu0 0.0
    %94 = vmatpush1.msra.mxu0 %v53
    %95 = vmatprep.subr.mxu0 0.0
    %96 = vmatpush1.msra.mxu0 %v52
    %97 = vmatprep.subr.mxu0 0.0
    %98 = vmatpush1.msra.mxu0 %v51
    %99 = vmatprep.subr.mxu0 0.0
    %100 = vmatpush1.msra.mxu0 %v50
    %101 = vmatprep.subr.mxu0 0.0
    %102 = vmatpush1.msra.mxu0 %v49
    %103 = vmatprep.subr.mxu0 0.0
    %104 = vmatpush1.msra.mxu0 %v48
    %105 = vmatprep.subr.mxu0 0.0
    %106 = vmatpush1.msra.mxu0 %v47
    %107 = vmatprep.subr.mxu0 0.0
    %108 = vmatpush1.msra.mxu0 %v46
    %109 = vmatprep.subr.mxu0 0.0
    %110 = vmatpush1.msra.mxu0 %v45
    %111 = vmatprep.subr.mxu0 0.0
    %112 = vmatpush1.msra.mxu0 %v44
    %113 = vmatprep.subr.mxu0 0.0
    %114 = vmatpush1.msra.mxu0 %v43
    %115 = vmatprep.subr.mxu0 0.0
    %116 = vmatpush1.msra.mxu0 %v42
    %117 = vmatprep.subr.mxu0 0.0
    %118 = vmatpush2.msra.mxu0 0.0
    %119 = vmatprep.subr.mxu0 0.0
    %120 = vmatpush2.msra.mxu0 0.0
    %121 = vmatprep.subr.mxu0 0.0
    %122 = vmatpush2.msra.mxu0 0.0
    %123 = vmatprep.subr.mxu0 0.0
    %124 = vmatpush2.msra.mxu0 0.0
    %125 = vmatprep.subr.mxu0 0.0
    %126 = vmatpush2.msra.mxu0 0.0
    %127 = vmatprep.subr.mxu0 0.0
    %128 = vmatpush2.msra.mxu0 0.0
    %129 = vmatprep.subr.mxu0 0.0
    %130 = vmatpush2.msra.mxu0 0.0
    %131 = vmatprep.subr.mxu0 0.0
    %132 = vmatpush2.msra.mxu0 0.0
    %133 = vmatprep.subr.mxu0 0.0
    %134 = vmatpush2.msra.mxu0 0.0
    %135 = vmatprep.subr.mxu0 0.0
    %136 = vmatpush2.msra.mxu0 0.0
    %137 = vmatprep.subr.mxu0 0.0
    %138 = vmatpush2.msra.mxu0 0.0
    %139 = vmatprep.subr.mxu0 0.0
    %140 = vmatpush2.msra.mxu0 0.0
    %141 = vmatprep.subr.mxu0 0.0
    %142 = vmatpush2.msra.mxu0 0.0
    %143 = vmatprep.subr.mxu0 0.0
    %144 = vmatpush2.msra.mxu0 0.0
    %145 = vmatprep.subr.mxu0 0.0
    %146 = vmatpush2.msra.mxu0 0.0
    %147 = vmatprep.subr.mxu0 0.0
    %148 = vmatpush2.msra.mxu0 0.0
    %149 = vmatprep.mubr.f32.mxu0 0.0
    %150 = vmatmul.mubr.f32.gmra.mxu0 %v41
    %v151 = vpop.f32.mrf.mxu0
    %v152 = vadd.f32 %v83, %v151
    %v153 = vpop.f32.mrf.mxu0
    %154 = vdwg.mxu0
    %v155 = vmax.f32 %v152, 0.0
    %vm156 = vcmask 64512
    %v158 = vsel %vm156, 1.0, 0
    %160 = vmatprep.subr.mxu0 0.0
    %161 = vmatpush1.msra.mxu0 0.0
    %162 = vmatprep.subr.mxu0 0.0
    %163 = vmatpush1.msra.mxu0 0.0
    %164 = vmatprep.subr.mxu0 0.0
    %165 = vmatpush1.msra.mxu0 0.0
    %166 = vmatprep.subr.mxu0 0.0
    %167 = vmatpush1.msra.mxu0 0.0
    %168 = vmatprep.subr.mxu0 0.0
    %169 = vmatpush1.msra.mxu0 0.0
    %170 = vmatprep.subr.mxu0 0.0
    %171 = vmatpush1.msra.mxu0 0.0
    %172 = vmatprep.subr.mxu0 0.0
    %173 = vmatpush1.msra.mxu0 0.0
    %174 = vmatprep.subr.mxu0 0.0
    %175 = vmatpush1.msra.mxu0 0.0
    %176 = vmatprep.subr.mxu0 0.0
    %177 = vmatpush1.msra.mxu0 0.0
    %178 = vmatprep.subr.mxu0 0.0
    %179 = vmatpush1.msra.mxu0 0.0
    %180 = vmatprep.subr.mxu0 0.0
    %181 = vmatpush1.msra.mxu0 0.0
    %182 = vmatprep.subr.mxu0 0.0
    %183 = vmatpush1.msra.mxu0 0.0
    %184 = vmatprep.subr.mxu0 0.0
    %185 = vmatpush1.msra.mxu0 0.0
    %186 = vmatprep.subr.mxu0 0.0
    %187 = vmatpush1.msra.mxu0 0.0
    %188 = vmatprep.subr.mxu0 0.0
    %189 = vmatpush1.msra.mxu0 0.0
    %190 = vmatprep.subr.mxu0 0.0
    %191 = vmatpush1.msra.mxu0 %v155
    %192 = vmatprep.subr.mxu0 0.0
    %193 = vmatpush2.msra.mxu0 0.0
    %194 = vmatprep.subr.mxu0 0.0
    %195 = vmatpush2.msra.mxu0 0.0
    %196 = vmatprep.subr.mxu0 0.0
    %197 = vmatpush2.msra.mxu0 0.0
    %198 = vmatprep.subr.mxu0 0.0
    %199 = vmatpush2.msra.mxu0 0.0
    %200 = vmatprep.subr.mxu0 0.0
    %201 = vmatpush2.msra.mxu0 0.0
    %202 = vmatprep.subr.mxu0 0.0
    %203 = vmatpush2.msra.mxu0 0.0
    %204 = vmatprep.subr.mxu0 0.0
    %205 = vmatpush2.msra.mxu0 0.0
    %206 = vmatprep.subr.mxu0 0.0
    %207 = vmatpush2.msra.mxu0 0.0
    %208 = vmatprep.subr.mxu0 0.0
    %209 = vmatpush2.msra.mxu0 0.0
    %210 = vmatprep.subr.mxu0 0.0
    %211 = vmatpush2.msra.mxu0 0.0
    %212 = vmatprep.subr.mxu0 0.0
    %213 = vmatpush2.msra.mxu0 0.0
    %214 = vmatprep.subr.mxu0 0.0
    %215 = vmatpush2.msra.mxu0 0.0
    %216 = vmatprep.subr.mxu0 0.0
    %217 = vmatpush2.msra.mxu0 0.0
    %218 = vmatprep.subr.mxu0 0.0
    %219 = vmatpush2.msra.mxu0 0.0
    %220 = vmatprep.subr.mxu0 0.0
    %221 = vmatpush2.msra.mxu0 0.0
    %222 = vmatprep.subr.mxu0 0.0
    %223 = vmatpush2.msra.mxu0 0.0
    %224 = vmatprep.mubr.f32.mxu0 0.0
    %225 = vmatmul.mubr.f32.gmra.mxu0 %v158
    %v226 = vpop.f32.mrf.mxu0
    %v227 = vadd.f32 0.0, %v226
    %v228 = vpop.f32.mrf.mxu0
    %229 = vdwg.mxu0
    %v230 = vmul.f32 %v227, 0.125
    %v231 = vlaneseq
    %v232 = vshrl.u32 %v231, 7
    %v233 = vsub.s32 0, %v232
    %v234 = vrot.slane %v230, %v233
    %v235 = vsub.f32 %v155, %v234
    %v236 = vmul.f32 %v235, %v235
    %237 = vmatprep.subr.mxu0 0.0
    %238 = vmatpush1.msra.mxu0 0.0
    %239 = vmatprep.subr.mxu0 0.0
    %240 = vmatpush1.msra.mxu0 0.0
    %241 = vmatprep.subr.mxu0 0.0
    %242 = vmatpush1.msra.mxu0 0.0
    %243 = vmatprep.subr.mxu0 0.0
    %244 = vmatpush1.msra.mxu0 0.0
    %245 = vmatprep.subr.mxu0 0.0
    %246 = vmatpush1.msra.mxu0 0.0
    %247 = vmatprep.subr.mxu0 0.0
    %248 = vmatpush1.msra.mxu0 0.0
    %249 = vmatprep.subr.mxu0 0.0
    %250 = vmatpush1.msra.mxu0 0.0
    %251 = vmatprep.subr.mxu0 0.0
    %252 = vmatpush1.msra.mxu0 0.0
    %253 = vmatprep.subr.mxu0 0.0
    %254 = vmatpush1.msra.mxu0 0.0
    %255 = vmatprep.subr.mxu0 0.0
    %256 = vmatpush1.msra.mxu0 0.0
    %257 = vmatprep.subr.mxu0 0.0
    %258 = vmatpush1.msra.mxu0 0.0
    %259 = vmatprep.subr.mxu0 0.0
    %260 = vmatpush1.msra.mxu0 0.0
    %261 = vmatprep.subr.mxu0 0.0
    %262 = vmatpush1.msra.mxu0 0.0
    %263 = vmatprep.subr.mxu0 0.0
    %264 = vmatpush1.msra.mxu0 0.0
    %265 = vmatprep.subr.mxu0 0.0
    %266 = vmatpush1.msra.mxu0 0.0
    %267 = vmatprep.subr.mxu0 0.0
    %268 = vmatpush1.msra.mxu0 %v236
    %269 = vmatprep.subr.mxu0 0.0
    %270 = vmatpush2.msra.mxu0 0.0
    %271 = vmatprep.subr.mxu0 0.0
    %272 = vmatpush2.msra.mxu0 0.0
    %273 = vmatprep.subr.mxu0 0.0
    %274 = vmatpush2.msra.mxu0 0.0
    %275 = vmatprep.subr.mxu0 0.0
    %276 = vmatpush2.msra.mxu0 0.0
    %277 = vmatprep.subr.mxu0 0.0
    %278 = vmatpush2.msra.mxu0 0.0
    %279 = vmatprep.subr.mxu0 0.0
    %280 = vmatpush2.msra.mxu0 0.0
    %281 = vmatprep.subr.mxu0 0.0
    %282 = vmatpush2.msra.mxu0 0.0
    %283 = vmatprep.subr.mxu0 0.0
    %284 = vmatpush2.msra.mxu0 0.0
    %285 = vmatprep.subr.mxu0 0.0
    %286 = vmatpush2.msra.mxu0 0.0
    %287 = vmatprep.subr.mxu0 0.0
    %288 = vmatpush2.msra.mxu0 0.0
    %289 = vmatprep.subr.mxu0 0.0
    %290 = vmatpush2.msra.mxu0 0.0
    %291 = vmatprep.subr.mxu0 0.0
    %292 = vmatpush2.msra.mxu0 0.0
    %293 = vmatprep.subr.mxu0 0.0
    %294 = vmatpush2.msra.mxu0 0.0
    %295 = vmatprep.subr.mxu0 0.0
    %296 = vmatpush2.msra.mxu0 0.0
    %297 = vmatprep.subr.mxu0 0.0
    %298 = vmatpush2.msra.mxu0 0.0
    %299 = vmatprep.subr.mxu0 0.0
    %300 = vmatpush2.msra.mxu0 0.0
    %301 = vmatprep.mubr.f32.mxu0 0.0
    %302 = vmatmul.mubr.f32.gmra.mxu0 %v158
    %v303 = vpop.f32.mrf.mxu0
    %v304 = vadd.f32 0.0, %v303
    %v305 = vpop.f32.mrf.mxu0
    %306 = vdwg.mxu0
    %v307 = vmul.f32 %v304, 0.125
    %v308 = vmul.f32 %v59, %v61
    %v309 = vadd.f32 %v307, 1e-05
    %v310 = vrsqrt.pop %v309
    %v311 = vmul.f32 %v308, %v310
    %v313 = vlaneseq
    %v314 = vshrl.u32 %v313, 7
    %v315 = vsub.s32 0, %v314
    %v316 = vrot.slane %v311, %v315
    %v318 = vmul.f32 %v155, %v316
    %v319 = vmul.f32 %v60, %v61
    %v320 = vmul.f32 %v230, %v311
    %v321 = vsub.f32 %v319, %v320
    %322 = vmatprep.subr.mxu0 0.0
    %323 = vmatpush1.msra.mxu0 %v78
    %324 = vmatprep.subr.mxu0 0.0
    %325 = vmatpush1.msra.mxu0 %v77
    %326 = vmatprep.subr.mxu0 0.0
    %327 = vmatpush1.msra.mxu0 %v76
    %328 = vmatprep.subr.mxu0 0.0
    %329 = vmatpush1.msra.mxu0 %v75
    %330 = vmatprep.subr.mxu0 0.0
    %331 = vmatpush1.msra.mxu0 %v74
    %332 = vmatprep.subr.mxu0 0.0
    %333 = vmatpush1.msra.mxu0 %v73
    %334 = vmatprep.subr.mxu0 0.0
    %335 = vmatpush1.msra.mxu0 %v72
    %336 = vmatprep.subr.mxu0 0.0
    %337 = vmatpush1.msra.mxu0 %v71
    %338 = vmatprep.subr.mxu0 0.0
    %339 = vmatpush1.msra.mxu0 %v70
    %340 = vmatprep.subr.mxu0 0.0
    %341 = vmatpush1.msra.mxu0 %v69
    %342 = vmatprep.subr.mxu0 0.0
    %343 = vmatpush1.msra.mxu0 %v68
    %344 = vmatprep.subr.mxu0 0.0
    %345 = vmatpush1.msra.mxu0 %v67
    %346 = vmatprep.subr.mxu0 0.0
    %347 = vmatpush1.msra.mxu0 %v66
    %348 = vmatprep.subr.mxu0 0.0
    %349 = vmatpush1.msra.mxu0 %v65
    %350 = vmatprep.subr.mxu0 0.0
    %351 = vmatpush1.msra.mxu0 %v64
    %352 = vmatprep.subr.mxu0 0.0
    %353 = vmatpush1.msra.mxu0 %v63
    %354 = vmatprep.subr.mxu0 0.0
    %355 = vmatpush2.msra.mxu0 0.0
    %356 = vmatprep.subr.mxu0 0.0
    %357 = vmatpush2.msra.mxu0 0.0
    %358 = vmatprep.subr.mxu0 0.0
    %359 = vmatpush2.msra.mxu0 0.0
    %360 = vmatprep.subr.mxu0 0.0
    %361 = vmatpush2.msra.mxu0 0.0
    %362 = vmatprep.subr.mxu0 0.0
    %363 = vmatpush2.msra.mxu0 0.0
    %364 = vmatprep.subr.mxu0 0.0
    %365 = vmatpush2.msra.mxu0 0.0
    %366 = vmatprep.subr.mxu0 0.0
    %367 = vmatpush2.msra.mxu0 0.0
    %368 = vmatprep.subr.mxu0 0.0
    %369 = vmatpush2.msra.mxu0 0.0
    %370 = vmatprep.subr.mxu0 0.0
    %371 = vmatpush2.msra.mxu0 0.0
    %372 = vmatprep.subr.mxu0 0.0
    %373 = vmatpush2.msra.mxu0 0.0
    %374 = vmatprep.subr.mxu0 0.0
    %375 = vmatpush2.msra.mxu0 0.0
    %376 = vmatprep.subr.mxu0 0.0
    %377 = vmatpush2.msra.mxu0 0.0
    %378 = vmatprep.subr.mxu0 0.0
    %379 = vmatpush2.msra.mxu0 0.0
    %380 = vmatprep.subr.mxu0 0.0
    %381 = vmatpush2.msra.mxu0 0.0
    %382 = vmatprep.subr.mxu0 0.0
    %383 = vmatpush2.msra.mxu0 0.0
    %384 = vmatprep.subr.mxu0 0.0
    %385 = vmatpush2.msra.mxu0 0.0
    %386 = vmatprep.mubr.f32.mxu0 0.0
    %387 = vmatmul.mubr.f32.gmra.mxu0 %v321
    %v388 = vpop.f32.mrf.mxu0
    %v389 = vadd.f32 %v62, %v388
    %v390 = vpop.f32.mrf.mxu0
    %391 = vdwg.mxu0
    %v392 = vlaneseq
    %v393 = vshrl.u32 %v392, 7
    %v394 = vsub.s32 0, %v393
    %v395 = vrot.slane %v389, %v394
    %396 = vmatprep.subr.mxu0 0.0
    %397 = vmatpush1.msra.mxu0 %v78
    %398 = vmatprep.subr.mxu0 0.0
    %399 = vmatpush1.msra.mxu0 %v77
    %400 = vmatprep.subr.mxu0 0.0
    %401 = vmatpush1.msra.mxu0 %v76
    %402 = vmatprep.subr.mxu0 0.0
    %403 = vmatpush1.msra.mxu0 %v75
    %404 = vmatprep.subr.mxu0 0.0
    %405 = vmatpush1.msra.mxu0 %v74
    %406 = vmatprep.subr.mxu0 0.0
    %407 = vmatpush1.msra.mxu0 %v73
    %408 = vmatprep.subr.mxu0 0.0
    %409 = vmatpush1.msra.mxu0 %v72
    %410 = vmatprep.subr.mxu0 0.0
    %411 = vmatpush1.msra.mxu0 %v71
    %412 = vmatprep.subr.mxu0 0.0
    %413 = vmatpush1.msra.mxu0 %v70
    %414 = vmatprep.subr.mxu0 0.0
    %415 = vmatpush1.msra.mxu0 %v69
    %416 = vmatprep.subr.mxu0 0.0
    %417 = vmatpush1.msra.mxu0 %v68
    %418 = vmatprep.subr.mxu0 0.0
    %419 = vmatpush1.msra.mxu0 %v67
    %420 = vmatprep.subr.mxu0 0.0
    %421 = vmatpush1.msra.mxu0 %v66
    %422 = vmatprep.subr.mxu0 0.0
    %423 = vmatpush1.msra.mxu0 %v65
    %424 = vmatprep.subr.mxu0 0.0
    %425 = vmatpush1.msra.mxu0 %v64
    %426 = vmatprep.subr.mxu0 0.0
    %427 = vmatpush1.msra.mxu0 %v63
    %428 = vmatprep.subr.mxu0 0.0
    %429 = vmatpush2.msra.mxu0 0.0
    %430 = vmatprep.subr.mxu0 0.0
    %431 = vmatpush2.msra.mxu0 0.0
    %432 = vmatprep.subr.mxu0 0.0
    %433 = vmatpush2.msra.mxu0 0.0
    %434 = vmatprep.subr.mxu0 0.0
    %435 = vmatpush2.msra.mxu0 0.0
    %436 = vmatprep.subr.mxu0 0.0
    %437 = vmatpush2.msra.mxu0 0.0
    %438 = vmatprep.subr.mxu0 0.0
    %439 = vmatpush2.msra.mxu0 0.0
    %440 = vmatprep.subr.mxu0 0.0
    %441 = vmatpush2.msra.mxu0 0.0
    %442 = vmatprep.subr.mxu0 0.0
    %443 = vmatpush2.msra.mxu0 0.0
    %444 = vmatprep.subr.mxu0 0.0
    %445 = vmatpush2.msra.mxu0 0.0
    %446 = vmatprep.subr.mxu0 0.0
    %447 = vmatpush2.msra.mxu0 0.0
    %448 = vmatprep.subr.mxu0 0.0
    %449 = vmatpush2.msra.mxu0 0.0
    %450 = vmatprep.subr.mxu0 0.0
    %451 = vmatpush2.msra.mxu0 0.0
    %452 = vmatprep.subr.mxu0 0.0
    %453 = vmatpush2.msra.mxu0 0.0
    %454 = vmatprep.subr.mxu0 0.0
    %455 = vmatpush2.msra.mxu0 0.0
    %456 = vmatprep.subr.mxu0 0.0
    %457 = vmatpush2.msra.mxu0 0.0
    %458 = vmatprep.subr.mxu0 0.0
    %459 = vmatpush2.msra.mxu0 0.0
    %460 = vmatprep.mubr.f32.mxu0 0.0
    %461 = vmatmul.mubr.f32.gmra.mxu0 %v318
    %v462 = vpop.f32.mrf.mxu0
    %v463 = vadd.f32 %v395, %v462
    %v464 = vpop.f32.mrf.mxu0
    %465 = vdwg.mxu0
    %vm466 = vcmask 31744
    %467 = vst.msk [vmem:[%s8] sm:$0xff] %vm466, %v463
    // Predicated region
    $region38: #{tpu_custom_call.1} parent=1 // pred_check
      _
    $region39: #{tpu_custom_call.1} parent=1 // pred_check_branch
      %469 = sbr.rel (0) target = $region41
    $region40: #{tpu_custom_call.1} parent=1 // pred_region
      _
    $region41: #{tpu_custom_call.1} parent=1 // pred_fallthru
      _
    // Predicated region
    $region42: #{tpu_custom_call.1} parent=1 // pred_check
      _
    $region43: #{tpu_custom_call.1} parent=1 // pred_check_branch
      %471 = sbr.rel (0) target = $region45
    $region44: #{tpu_custom_call.1} parent=1 // pred_region
      _
    $region45: #{tpu_custom_call.1} parent=1 // pred_fallthru
      _
    %472 = vsyncpa [#allocation3], 1

</llo_original>
